<compile_context>
chip_gen: v7x
topology: tpu7x:2x2x1
jax: 0.10.0
libtpu: 0.0.40
codegen_flags: <defaults>
</compile_context>

<pallas_src>
import functools
import math

import numpy as np

import jax
import jax.numpy as jnp
from jax.experimental import pallas as pl
from jax.experimental.pallas import tpu as pltpu


_VMEM_LIMIT_BYTES = 32 * 1024 * 1024   # explicit; safe on v5e / v6e / v7x
_RESIDENT_B_BUDGET = 8 * 1024 * 1024   # cap for the double-buffered B panel
_DEF_TM = 256                          # 256 fills the v6e/v7x 256x256 MXU
_DEF_TK = 256                          # (auto-shrinks to 128 for tiny N / v5e)


def _round_up(v, m):
    return ((v + m - 1) // m) * m


def _pad2d(a, rows, cols):
    r, c = a.shape
    if r == rows and c == cols:
        return a
    return jnp.pad(a, ((0, rows - r), (0, cols - c)))


def _pick_tile(n, target):
    """Largest power-of-two multiple of 128 <= target, capped near the problem
    size so tiny problems are not over-padded."""
    t = 128
    cap = _round_up(max(n, 1), 128)
    while t * 2 <= target and t * 2 <= cap:
        t *= 2
    return t


# ---------------------------------------------------------------------------
# Host-side CSR -> block-sparse packing (done once per graph in practice).
# ---------------------------------------------------------------------------
def build_block_sparse(AR, AC, AVa, n, tm, tk, dtype):
    """Pack the CSR matrix into its occupied (tm, tk) blocks + SMEM schedule.

    Returns:
      a_blocks: (num_blocks, tm, tk) -- only the occupied blocks of A.
      cnt:  (n_bm,) int32            -- occupied blocks per row tile.
      ptr:  (n_bm*max_cnt,) int32    -- flat: packed index of the s-th block.
      sel:  (n_bm*max_cnt,) int32    -- flat: column-tile index of that block.
      max_cnt: int                   -- reduction-grid extent.
    Padding steps repeat the last occupied block (unchanged block index =>
    Pallas skips the DMA) and are masked off the MXU inside the kernel.
    """
    AR = np.asarray(AR)
    AC = np.asarray(AC).astype(np.int64)
    AVa = np.asarray(AVa)
    n_bm = _round_up(n, tm) // tm
    n_bk = _round_up(n, tk) // tk

    counts = np.diff(AR)
    rows = np.repeat(np.arange(n, dtype=np.int64), counts)
    rb, cb = rows // tm, AC // tk

    occ = np.zeros((n_bm, n_bk), dtype=bool)
    occ[rb, cb] = True
    blk_of = np.full((n_bm, n_bk), 0, dtype=np.int64)
    occ_ij = np.argwhere(occ)                       # row-tile-major order
    num_blocks = len(occ_ij)
    blk_of[occ_ij[:, 0], occ_ij[:, 1]] = np.arange(num_blocks)

    a_blocks = np.zeros((max(num_blocks, 1), tm, tk), dtype=np.float32)
    if len(rows):
        a_blocks[blk_of[rb, cb], rows % tm, AC % tk] = AVa

    cnt = occ.sum(axis=1).astype(np.int32)
    max_cnt = max(int(cnt.max()) if cnt.size else 1, 1)
    ptr = np.zeros((n_bm, max_cnt), dtype=np.int32)
    sel = np.zeros((n_bm, max_cnt), dtype=np.int32)
    for i in range(n_bm):
        ks = np.flatnonzero(occ[i])
        c = len(ks)
        if c:
            ptr[i, :c] = blk_of[i, ks]
            sel[i, :c] = ks
            ptr[i, c:] = ptr[i, c - 1]
            sel[i, c:] = sel[i, c - 1]
    return (jnp.asarray(a_blocks, dtype=dtype),
            jnp.asarray(cnt),
            jnp.asarray(ptr.reshape(-1)),   # flat 1-D: avoids SMEM 2-D padding
            jnp.asarray(sel.reshape(-1)),
            max_cnt)


# ---------------------------------------------------------------------------
# Block-sparse SpMM:  out = A_blocksparse @ B_dense
# ---------------------------------------------------------------------------
def _spmm_kernel(cnt_ref, ptr_ref, sel_ref, a_ref, b_ref, o_ref, acc_ref,
                 *, resident_b, tk, max_cnt):
    i = pl.program_id(1)     # row-tile index
    s = pl.program_id(2)     # position in this row tile's occupied-block list

    @pl.when(s == 0)
    def _():
        acc_ref[...] = jnp.zeros_like(acc_ref)

    @pl.when(s < cnt_ref[i])     # skip MXU work on padding steps / empty rows
    def _():
        a_tile = a_ref[0]                                     # (tm, tk)
        if resident_b:
            kblk = sel_ref[i * max_cnt + s]
            start = pl.multiple_of(kblk * tk, tk)
            b_tile = b_ref[pl.ds(start, tk), :]               # (tk, tn)
        else:
            b_tile = b_ref[...]
        acc_ref[...] += jnp.dot(a_tile, b_tile,
                                preferred_element_type=jnp.float32)

    @pl.when(s == pl.num_programs(2) - 1)
    def _():
        o_ref[...] = acc_ref[...].astype(o_ref.dtype)


def block_sparse_spmm(a_blocks, cnt, ptr, sel, max_cnt, b, *,
                      tm, tk, tn, n_rows_pad, out_dtype):
    """out[n_rows_pad, F] = A @ b, A given as packed occupied (tm, tk) blocks."""
    num_blocks = a_blocks.shape[0]
    k_pad, feat = b.shape
    assert k_pad % tk == 0 and feat % tn == 0 and n_rows_pad % tm == 0
    n_bm = n_rows_pad // tm
    n_bj = feat // tn
    itemsize = b.dtype.itemsize

    # Keep the dense feature operand VMEM-resident (DMA'd once per feature
    # tile) when its double-buffered panel fits a conservative budget — gated
    # so the config also fits v7x's smaller (64 MiB) VMEM.
    resident_b = (2 * k_pad * tn * itemsize) <= _RESIDENT_B_BUDGET

    # Feature axis outermost so the resident panel is fetched n_bj times total
    # (not once per (i, j)); the row-tile axis i supplies megacore parallelism.
    def a_map(j, i, s, cnt_ref, ptr_ref, sel_ref):
        return (ptr_ref[i * max_cnt + s], 0, 0)

    def o_map(j, i, s, cnt_ref, ptr_ref, sel_ref):
        return (i, j)

    if resident_b:
        def b_map(j, i, s, cnt_ref, ptr_ref, sel_ref):
            return (0, j)
        b_spec = pl.BlockSpec((k_pad, tn), b_map)
    else:
        def b_map(j, i, s, cnt_ref, ptr_ref, sel_ref):
            return (sel_ref[i * max_cnt + s], j)
        b_spec = pl.BlockSpec((tk, tn), b_map)

    kernel = functools.partial(_spmm_kernel, resident_b=resident_b, tk=tk,
                               max_cnt=max_cnt)

    flops = 2 * num_blocks * tm * tk * feat
    a_bytes = int(a_blocks.size) * a_blocks.dtype.itemsize * n_bj
    b_bytes = (n_bj * k_pad * tn * itemsize if resident_b
               else num_blocks * tk * tn * itemsize * n_bj)
    o_bytes = n_rows_pad * feat * jnp.dtype(out_dtype).itemsize

    return pl.pallas_call(
        kernel,
        out_shape=jax.ShapeDtypeStruct((n_rows_pad, feat), out_dtype),
        grid_spec=pltpu.PrefetchScalarGridSpec(
            num_scalar_prefetch=3,
            grid=(n_bj, n_bm, max_cnt),
            in_specs=[pl.BlockSpec((1, tm, tk), a_map), b_spec],
            out_specs=pl.BlockSpec((tm, tn), o_map),
            scratch_shapes=[pltpu.VMEM((tm, tn), jnp.float32)]),
        compiler_params=pltpu.CompilerParams(
            dimension_semantics=("parallel", "parallel", "arbitrary"),
            vmem_limit_bytes=_VMEM_LIMIT_BYTES),
        cost_estimate=pl.CostEstimate(
            flops=int(flops), transcendentals=0,
            bytes_accessed=int(a_bytes + b_bytes + o_bytes)),
    )(cnt, ptr, sel, a_blocks, b)


# ---------------------------------------------------------------------------
# Small dense matmul (the X@W / H@W side of the association).
# ---------------------------------------------------------------------------
def _dense_mm_single_k_kernel(a_ref, b_ref, o_ref):
    # K fits one block: no accumulator scratch, no init/finalize branches.
    o_ref[...] = jnp.dot(a_ref[...], b_ref[...],
                         preferred_element_type=jnp.float32).astype(o_ref.dtype)


def _dense_mm_acc_kernel(a_ref, b_ref, o_ref, acc_ref):
    @pl.when(pl.program_id(2) == 0)
    def _():
        acc_ref[...] = jnp.zeros_like(acc_ref)
    acc_ref[...] += jnp.dot(a_ref[...], b_ref[...],
                            preferred_element_type=jnp.float32)
    @pl.when(pl.program_id(2) == pl.num_programs(2) - 1)
    def _():
        o_ref[...] = acc_ref[...].astype(o_ref.dtype)


def dense_matmul(a, b, *, tm=128, tn=128, out_dtype=jnp.float32,
                 max_single_k=2048):
    m, k = a.shape
    k2, n = b.shape
    assert k == k2 and m % tm == 0 and n % tn == 0
    ce = pl.CostEstimate(
        flops=int(2 * m * n * k), transcendentals=0,
        bytes_accessed=int(int(a.size) * a.dtype.itemsize
                           + int(b.size) * b.dtype.itemsize
                           + m * n * jnp.dtype(out_dtype).itemsize))
    if k <= max_single_k:
        return pl.pallas_call(
            _dense_mm_single_k_kernel,
            out_shape=jax.ShapeDtypeStruct((m, n), out_dtype),
            grid_spec=pltpu.PrefetchScalarGridSpec(
                num_scalar_prefetch=0,
                grid=(m // tm, n // tn),
                in_specs=[pl.BlockSpec((tm, k), lambda i, j: (i, 0)),
                          pl.BlockSpec((k, tn), lambda i, j: (0, j))],
                out_specs=pl.BlockSpec((tm, tn), lambda i, j: (i, j))),
            compiler_params=pltpu.CompilerParams(
                dimension_semantics=("parallel", "parallel"),
                vmem_limit_bytes=_VMEM_LIMIT_BYTES),
            cost_estimate=ce,
        )(a, b)
    tk = next(t for t in (1024, 512, 256, 128) if k % t == 0)
    return pl.pallas_call(
        _dense_mm_acc_kernel,
        out_shape=jax.ShapeDtypeStruct((m, n), out_dtype),
        grid_spec=pltpu.PrefetchScalarGridSpec(
            num_scalar_prefetch=0,
            grid=(m // tm, n // tn, k // tk),
            in_specs=[pl.BlockSpec((tm, tk), lambda i, j, kk: (i, kk)),
                      pl.BlockSpec((tk, tn), lambda i, j, kk: (kk, j))],
            out_specs=pl.BlockSpec((tm, tn), lambda i, j, kk: (i, j)),
            scratch_shapes=[pltpu.VMEM((tm, tn), jnp.float32)]),
        compiler_params=pltpu.CompilerParams(
            dimension_semantics=("parallel", "parallel", "arbitrary"),
            vmem_limit_bytes=_VMEM_LIMIT_BYTES),
        cost_estimate=ce,
    )(a, b)


# ---------------------------------------------------------------------------
# myLinear forward:  out = A_csr @ (x @ w)
# ---------------------------------------------------------------------------
def my_linear_forward(AR, AC, AVa, offset, x, w, *,
                      compute_dtype=jnp.bfloat16):
    del offset   # CUDA load-balancing hint; no semantic effect.
    n_nodes, f_in = x.shape
    f_in2, f_out = w.shape
    assert f_in == f_in2

    tm = _pick_tile(n_nodes, _DEF_TM)
    tk = _pick_tile(n_nodes, _DEF_TK)
    n_pad_m = _round_up(n_nodes, tm)   # output-row padding
    n_pad_k = _round_up(n_nodes, tk)   # feature-matrix row padding

    # Feature dims padded only to one 128 lane tile (tn never padded past the
    # real feature width; 256 only when it divides the padded width exactly).
    f_in_pad = _round_up(f_in, 128)
    f_out_pad = _round_up(f_out, 128)
    tn_in = 256 if f_in_pad % 256 == 0 else 128
    tn_out = 256 if f_out_pad % 256 == 0 else 128

    a_blocks, cnt, ptr, sel, max_cnt = build_block_sparse(
        AR, AC, AVa, n_nodes, tm, tk, compute_dtype)

    x_p = _pad2d(x.astype(compute_dtype), n_pad_k, f_in_pad)
    w_p = _pad2d(w.astype(compute_dtype), f_in_pad, f_out_pad)

    if f_in <= f_out:
        # (A @ X) @ W : the dominant SpMM runs over the narrower feature width.
        h = block_sparse_spmm(a_blocks, cnt, ptr, sel, max_cnt, x_p,
                              tm=tm, tk=tk, tn=tn_in, n_rows_pad=n_pad_m,
                              out_dtype=compute_dtype)
        out_p = dense_matmul(h, w_p, tm=128, tn=tn_out, out_dtype=jnp.float32)
    else:
        # A @ (X @ W)
        xw = dense_matmul(x_p, w_p, tm=128, tn=tn_out, out_dtype=compute_dtype)
        out_p = block_sparse_spmm(a_blocks, cnt, ptr, sel, max_cnt, xw,
                                  tm=tm, tk=tk, tn=tn_out, n_rows_pad=n_pad_m,
                                  out_dtype=jnp.float32)
    return out_p[:n_nodes, :f_out]


# ---------------------------------------------------------------------------
# Deterministic example graph + reference.
# ---------------------------------------------------------------------------
def build_csr_adjacency(n):
    """Ring graph with self loops, mean-normalized (1/3 per edge)."""
    ar, ac, av = [0], [], []
    for i in range(n):
        nbrs = sorted({(i - 1) % n, i, (i + 1) % n})
        ac.extend(nbrs)
        av.extend([1.0 / 3.0] * len(nbrs))
        ar.append(len(ac))
    AR = np.asarray(ar, dtype=np.int32)
    AC = np.asarray(ac, dtype=np.int32)
    AVa = np.asarray(av, dtype=np.float32)
    offset = np.zeros((n,), dtype=np.int32)   # partitioning hint (unused)
    return AR, AC, AVa, offset


def csr_to_dense(AR, AC, AVa, n):
    counts = np.diff(AR)
    rows = np.repeat(np.arange(n), counts)
    dense = np.zeros((n, n), dtype=np.float64)
    dense[rows, AC] = AVa
    return dense


if __name__ == "__main__":
    # Shapes consistent with the module: N=16 nodes, input_size=8, output=32.
    N, input_size, output_size = 16, 8, 32

    key = jax.random.PRNGKey(0)
    kx, kw = jax.random.split(key)

    # myLinear.__init__: w = randn(in, out) then uniform(-stdv, stdv),
    # stdv = 1/sqrt(output_size).
    stdv = 1.0 / math.sqrt(output_size)
    w = jax.random.uniform(kw, (input_size, output_size),
                           dtype=jnp.float32, minval=-stdv, maxval=stdv)
    x = jax.random.normal(kx, (N, input_size), dtype=jnp.float32)

    AR, AC, AVa, offset = build_csr_adjacency(N)

    # Float64 numpy ground truth: A @ (x @ w).
    a_dense64 = csr_to_dense(AR, AC, AVa, N)
    ref = a_dense64 @ (np.asarray(x, np.float64) @ np.asarray(w, np.float64))

    # f32 operand path (tolerance sized for the TPU MXU's f32 matmul path).
    out_f32 = jax.block_until_ready(
        my_linear_forward(AR, AC, AVa, offset, x, w,
                          compute_dtype=jnp.float32))
    np.testing.assert_allclose(np.asarray(out_f32, np.float64), ref,
                               rtol=2e-2, atol=5e-3)

    # bf16 operand path (default; f32 MXU accumulation). Error is
    # degree-dependent (AVa = 1/3 and x quantize to bf16).
    out_bf16 = jax.block_until_ready(
        my_linear_forward(AR, AC, AVa, offset, x, w))
    np.testing.assert_allclose(np.asarray(out_bf16, np.float64), ref,
                               rtol=5e-2, atol=5e-2)

    print("KERNEL_OK")
</pallas_src>

<mosaic_0001>
module attributes {stable_mosaic.version = 11 : i64} {
  func.func @_spmm_kernel(%arg0: i32, %arg1: i32, %arg2: i32, %arg3: memref<1xi32, #tpu.memory_space<smem>>, %arg4: memref<1xi32, #tpu.memory_space<smem>>, %arg5: memref<1xi32, #tpu.memory_space<smem>>, %arg6: memref<1x128x128xf32, #tpu.memory_space<vmem>>, %arg7: memref<128x128xf32, #tpu.memory_space<vmem>>, %arg8: memref<128x128xf32, #tpu.memory_space<vmem>>, %arg9: memref<128x128xf32, #tpu.memory_space<vmem>>) attributes {dimension_semantics = [#tpu.dimension_semantics<parallel>, #tpu.dimension_semantics<parallel>, #tpu.dimension_semantics<arbitrary>], iteration_bounds = array<i64: 1, 1, 1>, scalar_prefetch = 3 : i64, scratch_operands = 1 : i64, tpu.core_type = #tpu.core_type<tc>, window_params = [{transform_indices = @transform_0, window_bounds = array<i64: 1, 128, 128>}, {transform_indices = @transform_1, window_bounds = array<i64: 128, 128>}, {transform_indices = @transform_2, window_bounds = array<i64: 128, 128>}]} {
    %c0_i32 = arith.constant 0 : i32
    %0 = arith.cmpi eq, %arg2, %c0_i32 : i32
    %1 = arith.extui %0 : i1 to i32
    %c0_i32_0 = arith.constant 0 : i32
    %2 = arith.cmpi ne, %1, %c0_i32_0 : i32
    scf.if %2 {
      %cst = arith.constant 0.000000e+00 : f32
      %11 = vector.broadcast %cst : f32 to vector<128x128xf32>
      %c0 = arith.constant 0 : index
      %c0_4 = arith.constant 0 : index
      %12 = vector.load %arg9[%c0, %c0_4] : memref<128x128xf32, #tpu.memory_space<vmem>>, vector<128x128xf32>
      tpu.vector_store %arg9[%c0, %c0_4], %11 {strides = array<i32>} : memref<128x128xf32, #tpu.memory_space<vmem>>, vector<128x128xf32>,
    } else {
    }
    %3 = arith.index_cast %arg1 : i32 to index
    %4 = memref.load %arg3[%3] : memref<1xi32, #tpu.memory_space<smem>>
    %5 = arith.cmpi slt, %arg2, %4 : i32
    %6 = arith.extui %5 : i1 to i32
    %c0_i32_1 = arith.constant 0 : i32
    %7 = arith.cmpi ne, %6, %c0_i32_1 : i32
    scf.if %7 {
      %c0 = arith.constant 0 : index
      %c0_4 = arith.constant 0 : index
      %c0_5 = arith.constant 0 : index
      %11 = vector.load %arg6[%c0, %c0_4, %c0_5] : memref<1x128x128xf32, #tpu.memory_space<vmem>>, vector<1x128x128xf32>
      %12 = vector.shape_cast %11 : vector<1x128x128xf32> to vector<128x128xf32>
      %c1_i32 = arith.constant 1 : i32
      %13 = arith.muli %arg1, %c1_i32 : i32
      %14 = arith.addi %13, %arg2 : i32
      %15 = arith.index_cast %14 : i32 to index
      %16 = memref.load %arg5[%15] : memref<1xi32, #tpu.memory_space<smem>>
      %c128_i32 = arith.constant 128 : i32
      %17 = arith.muli %16, %c128_i32 : i32
      %18 = tpu.assume_multiple %17, 128 : i32
      %19 = arith.index_cast %18 : i32 to index
      %c0_6 = arith.constant 0 : index
      %20 = vector.load %arg7[%19, %c0_6] : memref<128x128xf32, #tpu.memory_space<vmem>>, vector<128x128xf32>
      %c0_7 = arith.constant 0 : index
      %c0_8 = arith.constant 0 : index
      %21 = vector.load %arg9[%c0_7, %c0_8] : memref<128x128xf32, #tpu.memory_space<vmem>>, vector<128x128xf32>
      %cst = arith.constant dense<0.000000e+00> : vector<128x128xf32>
      %22 = tpu.matmul %12, %20, %cst {dimension_numbers = #tpu.dot_dimension_numbers<[1], [0], [0], [1], [0, 0, 1, 1], [], []>} : vector<128x128xf32>, vector<128x128xf32>, vector<128x128xf32> -> vector<128x128xf32>
      %23 = arith.addf %21, %22 : vector<128x128xf32>
      %c0_9 = arith.constant 0 : index
      %c0_10 = arith.constant 0 : index
      %24 = vector.load %arg9[%c0_9, %c0_10] : memref<128x128xf32, #tpu.memory_space<vmem>>, vector<128x128xf32>
      tpu.vector_store %arg9[%c0_9, %c0_10], %23 {strides = array<i32>} : memref<128x128xf32, #tpu.memory_space<vmem>>, vector<128x128xf32>,
    } else {
    }
    %c0_i32_2 = arith.constant 0 : i32
    %8 = arith.cmpi eq, %arg2, %c0_i32_2 : i32
    %9 = arith.extui %8 : i1 to i32
    %c0_i32_3 = arith.constant 0 : i32
    %10 = arith.cmpi ne, %9, %c0_i32_3 : i32
    scf.if %10 {
      %c0 = arith.constant 0 : index
      %c0_4 = arith.constant 0 : index
      %11 = vector.load %arg9[%c0, %c0_4] : memref<128x128xf32, #tpu.memory_space<vmem>>, vector<128x128xf32>
      %c0_5 = arith.constant 0 : index
      %c0_6 = arith.constant 0 : index
      %12 = vector.load %arg8[%c0_5, %c0_6] : memref<128x128xf32, #tpu.memory_space<vmem>>, vector<128x128xf32>
      tpu.vector_store %arg8[%c0_5, %c0_6], %11 {strides = array<i32>} : memref<128x128xf32, #tpu.memory_space<vmem>>, vector<128x128xf32>,
    } else {
    }
    return
  }
  func.func @transform_0(%arg0: i32, %arg1: i32, %arg2: i32, %arg3: memref<1xi32, #tpu.memory_space<smem>>, %arg4: memref<1xi32, #tpu.memory_space<smem>>, %arg5: memref<1xi32, #tpu.memory_space<smem>>) -> (i32, i32, i32) {
    %c1_i32 = arith.constant 1 : i32
    %0 = arith.muli %arg1, %c1_i32 : i32
    %1 = arith.addi %0, %arg2 : i32
    %2 = arith.index_cast %1 : i32 to index
    %3 = memref.load %arg4[%2] : memref<1xi32, #tpu.memory_space<smem>>
    %c0_i32 = arith.constant 0 : i32
    %c0_i32_0 = arith.constant 0 : i32
    %c0_i32_1 = arith.constant 0 : i32
    return %3, %c0_i32, %c0_i32_0 : i32, i32, i32
  }
  func.func @transform_1(%arg0: i32, %arg1: i32, %arg2: i32, %arg3: memref<1xi32, #tpu.memory_space<smem>>, %arg4: memref<1xi32, #tpu.memory_space<smem>>, %arg5: memref<1xi32, #tpu.memory_space<smem>>) -> (i32, i32) {
    %c0_i32 = arith.constant 0 : i32
    %c0_i32_0 = arith.constant 0 : i32
    return %c0_i32, %arg0 : i32, i32
  }
  func.func @transform_2(%arg0: i32, %arg1: i32, %arg2: i32, %arg3: memref<1xi32, #tpu.memory_space<smem>>, %arg4: memref<1xi32, #tpu.memory_space<smem>>, %arg5: memref<1xi32, #tpu.memory_space<smem>>) -> (i32, i32) {
    %c0_i32 = arith.constant 0 : i32
    return %arg1, %arg0 : i32, i32
  }
}

</mosaic_0001>

<llo_original>
// kernel: tpu_custom_call.1
$region0: #{tpu_custom_call.1}
  #allocation0 [shape = 'u32[]', space=smem, size = 0x4, offset = 0x4, fixed_abs, tag = 'smem constant byte address 0x4 - core index']
  #allocation1 [shape = 'u32[144,128]{1,0:T(1,128)}', space=vmem, size = 0x12000, scoped, tag = 'internal scratch']
  #allocation2 [shape = 'f32[128,128]{1,0:T(8,128)}', space=vmem, size = 0x10000, scoped, tag = 'scratch operand']
  #allocation3 [shape = 's32[1]{0}', space=sflag, size = 0x4, scoped, tag = 'scoped memory for tpu_custom_call.1']
  #allocation4 [shape = 's32[1]{0:T(128)S(6)}', space=smem, size = 0x200, scoped, tag = 'prefetched SMEM operand 0']
  #allocation5 [shape = 's32[1]{0:T(128)S(6)}', space=smem, size = 0x200, scoped, tag = 'prefetched SMEM operand 1']
  #allocation6 [shape = 's32[1]{0:T(128)S(6)}', space=smem, size = 0x200, scoped, tag = 'prefetched SMEM operand 2']
  %s0 = inlined_call_operand.<no memory space> [shape: s32[1], index: 0, kind: input, shape index: {}]
  %s1 = inlined_call_operand.<no memory space> [shape: s32[1], index: 1, kind: input, shape index: {}]
  %s2 = inlined_call_operand.<no memory space> [shape: s32[1], index: 2, kind: input, shape index: {}]
  %s3 = inlined_call_operand.hbm [shape: f32[1,128,128], index: 3, kind: input, shape index: {}]
  %s4 = inlined_call_operand.hbm [shape: f32[128,128], index: 4, kind: input, shape index: {}]
  %s5 = inlined_call_operand.hbm [shape: f32[128,128], index: 5, kind: output, shape index: {}]
  %s6 = sld [smem:[#allocation0]]
  $region38: #{tpu_custom_call.1} parent=0
    _
  %s8 = ssub.s32 1, %s6
  %s9 = scalar_select 0, %s8, %s6
  %10 = sst [smem:[#allocation4]] %s0
  %11 = sst [smem:[#allocation5]] %s1
  %12 = sst [smem:[#allocation6]] %s2
  $region1: #{tpu_custom_call.1} parent=0
    #allocation7 [shape = 'u8[65536]{0}', space=vmem, size = 0x10000, scoped, tag = 'input window, operand 3, single buffered']
    #allocation8 [shape = 's32[1]{0}', space=sflag, size = 0x4, scoped, tag = 'scoped memory for tpu_custom_call.1']
    #allocation9 [shape = 's32[1]{0}', space=sflag, size = 0x4, scoped, tag = 'scoped memory for tpu_custom_call.1']
    #allocation10 [shape = 'u8[65536]{0}', space=vmem, size = 0x10000, scoped, tag = 'input window, operand 4, single buffered']
    #allocation11 [shape = 's32[1]{0}', space=sflag, size = 0x4, scoped, tag = 'scoped memory for tpu_custom_call.1']
    #allocation12 [shape = 'u8[65536]{0}', space=vmem, size = 0x10000, scoped, tag = 'output window, operand 0, single buffered']
    %13 = vsyncpa [#allocation8], 0
    %14 = vsyncpa [#allocation11], 0
    %15 = vsyncpa [#allocation9], 0
    // Predicated region
    $region2: #{tpu_custom_call.1} parent=1 // pred_check
      _
    $region3: #{tpu_custom_call.1} parent=1 // pred_check_branch
      %17 = sbr.rel (0) target = $region5
    $region4: #{tpu_custom_call.1} parent=1 // pred_region
      %s18 = sadd.s32 0, 0
      %s19 = sld [smem:[#allocation5 + %s18]]
      %s21 = ssub.s32 2048, 2048
      %22 = vsyncadd [#allocation8], %s21
      %s23 = smul.addr %s19, 16
      %s24 = smul.addr %s23, 128
      %s25 = scalar_lea.hbm %s3, %s24
      %s26 = sshll.u32 [#allocation7], 4
      %s27 = int_to_ptr.vmem [resolvable:$true] %s26
      %32 = dma.hbm_to_vmem [thread:$0]  %s25, 2048, %s27, [#allocation8], 128, 128, 8
    $region5: #{tpu_custom_call.1} parent=1 // pred_fallthru
      _
    // Predicated region
    $region6: #{tpu_custom_call.1} parent=1 // pred_check
      _
    $region7: #{tpu_custom_call.1} parent=1 // pred_check_branch
      %34 = sbr.rel (0) target = $region9
    $region8: #{tpu_custom_call.1} parent=1 // pred_region
      %s36 = ssub.s32 2048, 2048
      %37 = vsyncadd [#allocation11], %s36
      %s38 = sshll.u32 [#allocation10], 4
      %s39 = int_to_ptr.vmem [resolvable:$true] %s38
      %44 = dma.hbm_to_vmem [thread:$0]  %s4, 2048, %s39, [#allocation11], 128, 128, 8
    $region9: #{tpu_custom_call.1} parent=1 // pred_fallthru
      _
    // Predicated region
    $region10: #{tpu_custom_call.1} parent=1 // pred_check
      _
    $region11: #{tpu_custom_call.1} parent=1 // pred_check_branch
      %46 = sbr.rel (0) target = $region13
    $region12: #{tpu_custom_call.1} parent=1 // pred_region
      %47 = dma.done [#allocation8], 2048
    $region13: #{tpu_custom_call.1} parent=1 // pred_fallthru
      _
    // Predicated region
    $region14: #{tpu_custom_call.1} parent=1 // pred_check
      _
    $region15: #{tpu_custom_call.1} parent=1 // pred_check_branch
      %49 = sbr.rel (0) target = $region17
    $region16: #{tpu_custom_call.1} parent=1 // pred_region
      %50 = dma.done [#allocation11], 2048
    $region17: #{tpu_custom_call.1} parent=1 // pred_fallthru
      _
    %s51 = sadd.s32 0, 0
    %s52 = sld [smem:[#allocation5 + %s51]]
    %p53 = scmp.eq.s32.totalorder 0, 0
    // Predicated region
    $region18: #{tpu_custom_call.1} parent=1 // pred_check
      %p54 = pneg %p53
    $region19: #{tpu_custom_call.1} parent=1 // pred_check_branch
      %56 = sbr.rel (%p54) target = $region21
    $region20: #{tpu_custom_call.1} parent=1 // pred_region
      %57 = vst [vmem:[#allocation2] sm:$0xff] 0.0
      %58 = vst [vmem:[#allocation2 + $0x8] sm:$0xff] 0.0
      %59 = vst [vmem:[#allocation2 + $0x10] sm:$0xff] 0.0
      %60 = vst [vmem:[#allocation2 + $0x18] sm:$0xff] 0.0
      %61 = vst [vmem:[#allocation2 + $0x20] sm:$0xff] 0.0
      %62 = vst [vmem:[#allocation2 + $0x28] sm:$0xff] 0.0
      %63 = vst [vmem:[#allocation2 + $0x30] sm:$0xff] 0.0
      %64 = vst [vmem:[#allocation2 + $0x38] sm:$0xff] 0.0
      %65 = vst [vmem:[#allocation2 + $0x40] sm:$0xff] 0.0
      %66 = vst [vmem:[#allocation2 + $0x48] sm:$0xff] 0.0
      %67 = vst [vmem:[#allocation2 + $0x50] sm:$0xff] 0.0
      %68 = vst [vmem:[#allocation2 + $0x58] sm:$0xff] 0.0
      %69 = vst [vmem:[#allocation2 + $0x60] sm:$0xff] 0.0
      %70 = vst [vmem:[#allocation2 + $0x68] sm:$0xff] 0.0
      %71 = vst [vmem:[#allocation2 + $0x70] sm:$0xff] 0.0
      %72 = vst [vmem:[#allocation2 + $0x78] sm:$0xff] 0.0
    $region21: #{tpu_custom_call.1} parent=1 // pred_fallthru
      _
    %s73 = sld [smem:[#allocation4]]
    %p74 = scmp.lt.s32.totalorder 0, %s73
    // Predicated region
    $region22: #{tpu_custom_call.1} parent=1 // pred_check
      %p75 = pneg %p74
    $region23: #{tpu_custom_call.1} parent=1 // pred_check_branch
      %77 = sbr.rel (%p75) target = $region25
    $region24: #{tpu_custom_call.1} parent=1 // pred_region
      %v78 = vld [vmem:[#allocation7] sm:$0xff]
      %v79 = vld [vmem:[#allocation7 + $0x8] sm:$0xff]
      %v80 = vld [vmem:[#allocation7 + $0x10] sm:$0xff]
      %v81 = vld [vmem:[#allocation7 + $0x18] sm:$0xff]
      %v82 = vld [vmem:[#allocation7 + $0x20] sm:$0xff]
      %v83 = vld [vmem:[#allocation7 + $0x28] sm:$0xff]
      %v84 = vld [vmem:[#allocation7 + $0x30] sm:$0xff]
      %v85 = vld [vmem:[#allocation7 + $0x38] sm:$0xff]
      %v86 = vld [vmem:[#allocation7 + $0x40] sm:$0xff]
      %v87 = vld [vmem:[#allocation7 + $0x48] sm:$0xff]
      %v88 = vld [vmem:[#allocation7 + $0x50] sm:$0xff]
      %v89 = vld [vmem:[#allocation7 + $0x58] sm:$0xff]
      %v90 = vld [vmem:[#allocation7 + $0x60] sm:$0xff]
      %v91 = vld [vmem:[#allocation7 + $0x68] sm:$0xff]
      %v92 = vld [vmem:[#allocation7 + $0x70] sm:$0xff]
      %v93 = vld [vmem:[#allocation7 + $0x78] sm:$0xff]
      %s94 = sadd.s32 0, 0
      %s95 = sld [smem:[#allocation6 + %s94]]
      %s96 = smul.u32 %s95, 128
      %s97 = scalar_lea.vmem [#allocation10], %s96
      %v98 = vld [vmem:[%s97] sm:$0xff]
      %v99 = vld [vmem:[%s97 + $0x8] sm:$0xff]
      %v100 = vld [vmem:[%s97 + $0x10] sm:$0xff]
      %v101 = vld [vmem:[%s97 + $0x18] sm:$0xff]
      %v102 = vld [vmem:[%s97 + $0x20] sm:$0xff]
      %v103 = vld [vmem:[%s97 + $0x28] sm:$0xff]
      %v104 = vld [vmem:[%s97 + $0x30] sm:$0xff]
      %v105 = vld [vmem:[%s97 + $0x38] sm:$0xff]
      %v106 = vld [vmem:[%s97 + $0x40] sm:$0xff]
      %v107 = vld [vmem:[%s97 + $0x48] sm:$0xff]
      %v108 = vld [vmem:[%s97 + $0x50] sm:$0xff]
      %v109 = vld [vmem:[%s97 + $0x58] sm:$0xff]
      %v110 = vld [vmem:[%s97 + $0x60] sm:$0xff]
      %v111 = vld [vmem:[%s97 + $0x68] sm:$0xff]
      %v112 = vld [vmem:[%s97 + $0x70] sm:$0xff]
      %v113 = vld [vmem:[%s97 + $0x78] sm:$0xff]
      %v114 = vld [vmem:[#allocation2] sm:$0xff]
      %v115 = vld [vmem:[#allocation2 + $0x8] sm:$0xff]
      %v116 = vld [vmem:[#allocation2 + $0x10] sm:$0xff]
      %v117 = vld [vmem:[#allocation2 + $0x18] sm:$0xff]
      %v118 = vld [vmem:[#allocation2 + $0x20] sm:$0xff]
      %v119 = vld [vmem:[#allocation2 + $0x28] sm:$0xff]
      %v120 = vld [vmem:[#allocation2 + $0x30] sm:$0xff]
      %v121 = vld [vmem:[#allocation2 + $0x38] sm:$0xff]
      %v122 = vld [vmem:[#allocation2 + $0x40] sm:$0xff]
      %v123 = vld [vmem:[#allocation2 + $0x48] sm:$0xff]
      %v124 = vld [vmem:[#allocation2 + $0x50] sm:$0xff]
      %v125 = vld [vmem:[#allocation2 + $0x58] sm:$0xff]
      %v126 = vld [vmem:[#allocation2 + $0x60] sm:$0xff]
      %v127 = vld [vmem:[#allocation2 + $0x68] sm:$0xff]
      %v128 = vld [vmem:[#allocation2 + $0x70] sm:$0xff]
      %v129 = vld [vmem:[#allocation2 + $0x78] sm:$0xff]
      %130 = vmatprep.subr.mxu0 0.0
      %131 = vmatpush1.msra.mxu0 %v98
      %132 = vmatprep.subr.mxu0 0.0
      %133 = vmatpush1.msra.mxu0 %v99
      %134 = vmatprep.subr.mxu0 0.0
      %135 = vmatpush1.msra.mxu0 %v100
      %136 = vmatprep.subr.mxu0 0.0
      %137 = vmatpush1.msra.mxu0 %v101
      %138 = vmatprep.subr.mxu0 0.0
      %139 = vmatpush1.msra.mxu0 %v102
      %140 = vmatprep.subr.mxu0 0.0
      %141 = vmatpush1.msra.mxu0 %v103
      %142 = vmatprep.subr.mxu0 0.0
      %143 = vmatpush1.msra.mxu0 %v104
      %144 = vmatprep.subr.mxu0 0.0
      %145 = vmatpush1.msra.mxu0 %v105
      %146 = vmatprep.subr.mxu0 0.0
      %147 = vmatpush1.msra.mxu0 %v106
      %148 = vmatprep.subr.mxu0 0.0
      %149 = vmatpush1.msra.mxu0 %v107
      %150 = vmatprep.subr.mxu0 0.0
      %151 = vmatpush1.msra.mxu0 %v108
      %152 = vmatprep.subr.mxu0 0.0
      %153 = vmatpush1.msra.mxu0 %v109
      %154 = vmatprep.subr.mxu0 0.0
      %155 = vmatpush1.msra.mxu0 %v110
      %156 = vmatprep.subr.mxu0 0.0
      %157 = vmatpush1.msra.mxu0 %v111
      %158 = vmatprep.subr.mxu0 0.0
      %159 = vmatpush1.msra.mxu0 %v112
      %160 = vmatprep.subr.mxu0 0.0
      %161 = vmatpush1.msra.mxu0 %v113
      %162 = vmatprep.subr.mxu0 0.0
      %163 = vmatpush1.msra.mxu0 0.0
      %164 = vmatprep.subr.mxu0 0.0
      %165 = vmatpush1.msra.mxu0 0.0
      %166 = vmatprep.subr.mxu0 0.0
      %167 = vmatpush1.msra.mxu0 0.0
      %168 = vmatprep.subr.mxu0 0.0
      %169 = vmatpush1.msra.mxu0 0.0
      %170 = vmatprep.subr.mxu0 0.0
      %171 = vmatpush1.msra.mxu0 0.0
      %172 = vmatprep.subr.mxu0 0.0
      %173 = vmatpush1.msra.mxu0 0.0
      %174 = vmatprep.subr.mxu0 0.0
      %175 = vmatpush1.msra.mxu0 0.0
      %176 = vmatprep.subr.mxu0 0.0
      %177 = vmatpush1.msra.mxu0 0.0
      %178 = vmatprep.subr.mxu0 0.0
      %179 = vmatpush1.msra.mxu0 0.0
      %180 = vmatprep.subr.mxu0 0.0
      %181 = vmatpush1.msra.mxu0 0.0
      %182 = vmatprep.subr.mxu0 0.0
      %183 = vmatpush1.msra.mxu0 0.0
      %184 = vmatprep.subr.mxu0 0.0
      %185 = vmatpush1.msra.mxu0 0.0
      %186 = vmatprep.subr.mxu0 0.0
      %187 = vmatpush1.msra.mxu0 0.0
      %188 = vmatprep.subr.mxu0 0.0
      %189 = vmatpush1.msra.mxu0 0.0
      %190 = vmatprep.subr.mxu0 0.0
      %191 = vmatpush1.msra.mxu0 0.0
      %192 = vmatprep.subr.mxu0 0.0
      %193 = vmatpush1.msra.mxu0 0.0
      %194 = vmatprep.mubr.f32.mxu0 0.0
      %195 = vmatmul.mubr.f32.gmra.mrb[0].mxu0 %v78
      %v196 = vpop.f32.mrb[0].mxu0
      %v197 = vadd.f32 0.0, %v196
      %v198 = vpop.f32.mrb[0].mxu0
      %199 = vmatprep.mubr.f32.mxu0 0.0
      %200 = vmatmul.mubr.f32.gmra.mrb[0].mxu0 %v79
      %v201 = vpop.f32.mrb[0].mxu0
      %v202 = vadd.f32 0.0, %v201
      %v203 = vpop.f32.mrb[0].mxu0
      %204 = vmatprep.mubr.f32.mxu0 0.0
      %205 = vmatmul.mubr.f32.gmra.mrb[0].mxu0 %v80
      %v206 = vpop.f32.mrb[0].mxu0
      %v207 = vadd.f32 0.0, %v206
      %v208 = vpop.f32.mrb[0].mxu0
      %209 = vmatprep.mubr.f32.mxu0 0.0
      %210 = vmatmul.mubr.f32.gmra.mrb[0].mxu0 %v81
      %v211 = vpop.f32.mrb[0].mxu0
      %v212 = vadd.f32 0.0, %v211
      %v213 = vpop.f32.mrb[0].mxu0
      %214 = vmatprep.mubr.f32.mxu0 0.0
      %215 = vmatmul.mubr.f32.gmra.mrb[0].mxu0 %v82
      %v216 = vpop.f32.mrb[0].mxu0
      %v217 = vadd.f32 0.0, %v216
      %v218 = vpop.f32.mrb[0].mxu0
      %219 = vmatprep.mubr.f32.mxu0 0.0
      %220 = vmatmul.mubr.f32.gmra.mrb[0].mxu0 %v83
      %v221 = vpop.f32.mrb[0].mxu0
      %v222 = vadd.f32 0.0, %v221
      %v223 = vpop.f32.mrb[0].mxu0
      %224 = vmatprep.mubr.f32.mxu0 0.0
      %225 = vmatmul.mubr.f32.gmra.mrb[0].mxu0 %v84
      %v226 = vpop.f32.mrb[0].mxu0
      %v227 = vadd.f32 0.0, %v226
      %v228 = vpop.f32.mrb[0].mxu0
      %229 = vmatprep.mubr.f32.mxu0 0.0
      %230 = vmatmul.mubr.f32.gmra.mrb[0].mxu0 %v85
      %v231 = vpop.f32.mrb[0].mxu0
      %v232 = vadd.f32 0.0, %v231
      %v233 = vpop.f32.mrb[0].mxu0
      %234 = vmatprep.mubr.f32.mxu0 0.0
      %235 = vmatmul.mubr.f32.gmra.mrb[0].mxu0 %v86
      %v236 = vpop.f32.mrb[0].mxu0
      %v237 = vadd.f32 0.0, %v236
      %v238 = vpop.f32.mrb[0].mxu0
      %239 = vmatprep.mubr.f32.mxu0 0.0
      %240 = vmatmul.mubr.f32.gmra.mrb[0].mxu0 %v87
      %v241 = vpop.f32.mrb[0].mxu0
      %v242 = vadd.f32 0.0, %v241
      %v243 = vpop.f32.mrb[0].mxu0
      %244 = vmatprep.mubr.f32.mxu0 0.0
      %245 = vmatmul.mubr.f32.gmra.mrb[0].mxu0 %v88
      %v246 = vpop.f32.mrb[0].mxu0
      %v247 = vadd.f32 0.0, %v246
      %v248 = vpop.f32.mrb[0].mxu0
      %249 = vmatprep.mubr.f32.mxu0 0.0
      %250 = vmatmul.mubr.f32.gmra.mrb[0].mxu0 %v89
      %v251 = vpop.f32.mrb[0].mxu0
      %v252 = vadd.f32 0.0, %v251
      %v253 = vpop.f32.mrb[0].mxu0
      %254 = vmatprep.mubr.f32.mxu0 0.0
      %255 = vmatmul.mubr.f32.gmra.mrb[0].mxu0 %v90
      %v256 = vpop.f32.mrb[0].mxu0
      %v257 = vadd.f32 0.0, %v256
      %v258 = vpop.f32.mrb[0].mxu0
      %259 = vmatprep.mubr.f32.mxu0 0.0
      %260 = vmatmul.mubr.f32.gmra.mrb[0].mxu0 %v91
      %v261 = vpop.f32.mrb[0].mxu0
      %v262 = vadd.f32 0.0, %v261
      %v263 = vpop.f32.mrb[0].mxu0
      %264 = vmatprep.mubr.f32.mxu0 0.0
      %265 = vmatmul.mubr.f32.gmra.mrb[0].mxu0 %v92
      %v266 = vpop.f32.mrb[0].mxu0
      %v267 = vadd.f32 0.0, %v266
      %v268 = vpop.f32.mrb[0].mxu0
      %269 = vmatprep.mubr.f32.mxu0 0.0
      %270 = vmatmul.mubr.f32.gmra.mrb[0].mxu0 %v93
      %v271 = vpop.f32.mrb[0].mxu0
      %v272 = vadd.f32 0.0, %v271
      %v273 = vpop.f32.mrb[0].mxu0
      %274 = vdwg.mxu0
      %v275 = vadd.f32 %v114, %v197
      %v276 = vadd.f32 %v115, %v202
      %v277 = vadd.f32 %v116, %v207
      %v278 = vadd.f32 %v117, %v212
      %v279 = vadd.f32 %v118, %v217
      %v280 = vadd.f32 %v119, %v222
      %v281 = vadd.f32 %v120, %v227
      %v282 = vadd.f32 %v121, %v232
      %v283 = vadd.f32 %v122, %v237
      %v284 = vadd.f32 %v123, %v242
      %v285 = vadd.f32 %v124, %v247
      %v286 = vadd.f32 %v125, %v252
      %v287 = vadd.f32 %v126, %v257
      %v288 = vadd.f32 %v127, %v262
      %v289 = vadd.f32 %v128, %v267
      %v290 = vadd.f32 %v129, %v272
      %291 = vst [vmem:[#allocation2] sm:$0xff] %v275
      %292 = vst [vmem:[#allocation2 + $0x8] sm:$0xff] %v276
      %293 = vst [vmem:[#allocation2 + $0x10] sm:$0xff] %v277
      %294 = vst [vmem:[#allocation2 + $0x18] sm:$0xff] %v278
      %295 = vst [vmem:[#allocation2 + $0x20] sm:$0xff] %v279
      %296 = vst [vmem:[#allocation2 + $0x28] sm:$0xff] %v280
      %297 = vst [vmem:[#allocation2 + $0x30] sm:$0xff] %v281
      %298 = vst [vmem:[#allocation2 + $0x38] sm:$0xff] %v282
      %299 = vst [vmem:[#allocation2 + $0x40] sm:$0xff] %v283
      %300 = vst [vmem:[#allocation2 + $0x48] sm:$0xff] %v284
      %301 = vst [vmem:[#allocation2 + $0x50] sm:$0xff] %v285
      %302 = vst [vmem:[#allocation2 + $0x58] sm:$0xff] %v286
      %303 = vst [vmem:[#allocation2 + $0x60] sm:$0xff] %v287
      %304 = vst [vmem:[#allocation2 + $0x68] sm:$0xff] %v288
      %305 = vst [vmem:[#allocation2 + $0x70] sm:$0xff] %v289
      %306 = vst [vmem:[#allocation2 + $0x78] sm:$0xff] %v290
    $region25: #{tpu_custom_call.1} parent=1 // pred_fallthru
      _
    // Predicated region
    $region26: #{tpu_custom_call.1} parent=1 // pred_check
      %p307 = pneg %p53
    $region27: #{tpu_custom_call.1} parent=1 // pred_check_branch
      %309 = sbr.rel (%p307) target = $region29
    $region28: #{tpu_custom_call.1} parent=1 // pred_region
      %v310 = vld [vmem:[#allocation2] sm:$0xff]
      %v311 = vld [vmem:[#allocation2 + $0x8] sm:$0xff]
      %v312 = vld [vmem:[#allocation2 + $0x10] sm:$0xff]
      %v313 = vld [vmem:[#allocation2 + $0x18] sm:$0xff]
      %v314 = vld [vmem:[#allocation2 + $0x20] sm:$0xff]
      %v315 = vld [vmem:[#allocation2 + $0x28] sm:$0xff]
      %v316 = vld [vmem:[#allocation2 + $0x30] sm:$0xff]
      %v317 = vld [vmem:[#allocation2 + $0x38] sm:$0xff]
      %v318 = vld [vmem:[#allocation2 + $0x40] sm:$0xff]
      %v319 = vld [vmem:[#allocation2 + $0x48] sm:$0xff]
      %v320 = vld [vmem:[#allocation2 + $0x50] sm:$0xff]
      %v321 = vld [vmem:[#allocation2 + $0x58] sm:$0xff]
      %v322 = vld [vmem:[#allocation2 + $0x60] sm:$0xff]
      %v323 = vld [vmem:[#allocation2 + $0x68] sm:$0xff]
      %v324 = vld [vmem:[#allocation2 + $0x70] sm:$0xff]
      %v325 = vld [vmem:[#allocation2 + $0x78] sm:$0xff]
      %326 = vst [vmem:[#allocation12] sm:$0xff] %v310
      %327 = vst [vmem:[#allocation12 + $0x8] sm:$0xff] %v311
      %328 = vst [vmem:[#allocation12 + $0x10] sm:$0xff] %v312
      %329 = vst [vmem:[#allocation12 + $0x18] sm:$0xff] %v313
      %330 = vst [vmem:[#allocation12 + $0x20] sm:$0xff] %v314
      %331 = vst [vmem:[#allocation12 + $0x28] sm:$0xff] %v315
      %332 = vst [vmem:[#allocation12 + $0x30] sm:$0xff] %v316
      %333 = vst [vmem:[#allocation12 + $0x38] sm:$0xff] %v317
      %334 = vst [vmem:[#allocation12 + $0x40] sm:$0xff] %v318
      %335 = vst [vmem:[#allocation12 + $0x48] sm:$0xff] %v319
      %336 = vst [vmem:[#allocation12 + $0x50] sm:$0xff] %v320
      %337 = vst [vmem:[#allocation12 + $0x58] sm:$0xff] %v321
      %338 = vst [vmem:[#allocation12 + $0x60] sm:$0xff] %v322
      %339 = vst [vmem:[#allocation12 + $0x68] sm:$0xff] %v323
      %340 = vst [vmem:[#allocation12 + $0x70] sm:$0xff] %v324
      %341 = vst [vmem:[#allocation12 + $0x78] sm:$0xff] %v325
    $region29: #{tpu_custom_call.1} parent=1 // pred_fallthru
      _
    // Predicated region
    $region30: #{tpu_custom_call.1} parent=1 // pred_check
      _
    $region31: #{tpu_custom_call.1} parent=1 // pred_check_branch
      %343 = sbr.rel (0) target = $region33
    $region32: #{tpu_custom_call.1} parent=1 // pred_region
      %s345 = ssub.s32 2048, 2048
      %346 = vsyncadd [#allocation9], %s345
      %s347 = sshll.u32 [#allocation12], 4
      %s348 = int_to_ptr.vmem [resolvable:$true] %s347
      %353 = dma.vmem_to_hbm [thread:$0]  %s348, 2048, %s5, [#allocation9], 128, 128, 8
    $region33: #{tpu_custom_call.1} parent=1 // pred_fallthru
      _
    // Predicated region
    $region34: #{tpu_custom_call.1} parent=1 // pred_check
      _
    $region35: #{tpu_custom_call.1} parent=1 // pred_check_branch
      %355 = sbr.rel (0) target = $region37
    $region36: #{tpu_custom_call.1} parent=1 // pred_region
      %356 = dma.done [#allocation9], 2048
    $region37: #{tpu_custom_call.1} parent=1 // pred_fallthru
      _
    %357 = vsyncpa [#allocation8], 1
    %358 = vsyncpa [#allocation11], 1
    %359 = vsyncpa [#allocation9], 1

</llo_original>
